<compile_context>
chip_gen: v7x
topology: tpu7x:2x2x1
jax: 0.10.0
libtpu: 0.0.40
codegen_flags: <defaults>
</compile_context>

<pallas_src>
import functools
import math

import jax
import jax.numpy as jnp
from jax.experimental import pallas as pl
from jax.experimental.pallas import tpu as pltpu


def _label_smoothing_kernel(x_ref, tgt_ref, out_ref, acc_ref, *,
                            tv, fill, conf_minus_fill, use_mxu):
    """acc[n,0] += fill*sum_v x[n,v] + (conf-fill)*x[n,tgt[n]] for this class tile;
    out[n,0] = -acc[n,0] at the last class tile."""
    j = pl.program_id(1)  # class-axis tile index (reduction axis, innermost)

    @pl.when(j == 0)
    def _init():
        acc_ref[...] = jnp.zeros_like(acc_ref)

    x = x_ref[...]                                   # native dtype (bf16 stays bf16)
    # Shift the (tn,1) targets instead of adding j*tv to the full (tn,tv) iota.
    tgt_local = tgt_ref[...] - j * tv                # (tn, 1) int32
    col = jax.lax.broadcasted_iota(jnp.int32, x_ref.shape, 1)
    picked = jnp.where(col == tgt_local, x, jnp.zeros_like(x))

    if use_mxu:
        # 16-bit inputs: offload the add-reduces to the idle MXU. x*1.0 products
        # are exact in bf16; accumulation happens in f32 on the MXU.
        ones = jnp.ones((x_ref.shape[1], 1), x.dtype)
        row_x = jnp.dot(x, ones, preferred_element_type=jnp.float32)
        row_pick = jnp.dot(picked, ones, preferred_element_type=jnp.float32)
    else:
        # f32 inputs: memory-bound on v5e/v6e; plain VPU/XLU reduce is fine.
        row_x = jnp.sum(x, axis=-1, keepdims=True, dtype=jnp.float32)
        row_pick = jnp.sum(picked, axis=-1, keepdims=True, dtype=jnp.float32)

    acc_ref[...] += fill * row_x + conf_minus_fill * row_pick

    @pl.when(j == pl.num_programs(1) - 1)
    def _finalize():
        out_ref[...] = -acc_ref[...]


def _round_up(a, m):
    return (a + m - 1) // m * m


def label_smoothing_loss(x, target, *, size, smoothing=0.0, tn=None, tv=None):
    """x: (N, size) log-probs (f32 or bf16, used as-is); target: (N,) class indices.
    Returns the scalar f32 loss == nn.KLDivLoss(reduction='sum')(x, true_dist)."""
    n, v = x.shape
    assert v == size
    itemsize = jnp.dtype(x.dtype).itemsize

    # Tile sizes: free choice (we pad), targeting ~8 MiB x blocks.
    if tn is None:
        # >= 2 row tiles where possible so the 'parallel' axis can split across
        # v7x's two TensorCores.
        tn = max(8, min(256, _round_up(max(n // 2, 1), 8)))
    if tv is None:
        cap = 16384 if itemsize <= 2 else 8192
        tv = min(cap, _round_up(v, 128))

    n_pad = _round_up(n, tn)
    v_pad = _round_up(v, tv)

    # Zero padding is harmless: padded columns contribute fill*0 == 0, padded
    # rows are all-zero (target padded with 0 selects a zero), real targets
    # never index a padded column.
    if (n_pad, v_pad) != (n, v):
        x = jnp.pad(x, ((0, n_pad - n), (0, v_pad - v)))
    tgt2d = target.astype(jnp.int32).reshape(n, 1)
    if n_pad != n:
        tgt2d = jnp.pad(tgt2d, ((0, n_pad - n), (0, 0)))

    confidence = 1.0 - smoothing
    # Guard size==2 / smoothing==0 edge (PyTorch module would divide by zero).
    fill = 0.0 if smoothing == 0.0 else smoothing / (size - 2)

    use_mxu = itemsize <= 2  # bf16/fp16: MXU reduce; f32: VPU reduce (exact)

    kernel = functools.partial(
        _label_smoothing_kernel,
        tv=tv, fill=fill, conf_minus_fill=confidence - fill, use_mxu=use_mxu,
    )

    per_row = pl.pallas_call(
        kernel,
        out_shape=jax.ShapeDtypeStruct((n_pad, 1), jnp.float32),
        grid=(n_pad // tn, v_pad // tv),
        in_specs=[
            pl.BlockSpec((tn, tv), lambda i, j: (i, j)),   # x tile
            # Target column block index is constant in j, so Pallas skips the
            # re-DMA; lane padding of the (tn,1) block is a tiny VMEM cost.
            pl.BlockSpec((tn, 1), lambda i, j: (i, 0)),
        ],
        # Same out block across j -> written back once per row tile (we only
        # store it at the last class tile; accumulation lives in scratch).
        out_specs=pl.BlockSpec((tn, 1), lambda i, j: (i, 0)),
        scratch_shapes=[pltpu.VMEM((tn, 1), jnp.float32)],
        compiler_params=pltpu.CompilerParams(
            dimension_semantics=("parallel", "arbitrary"),
            # ~8 MiB x blocks double-buffered (~16 MiB) + small blocks: raise the
            # scoped limit with headroom (safe on all chips: < 64 MiB physical).
            vmem_limit_bytes=48 * 1024 * 1024,
        ),
    )(x, tgt2d)

    # Trace-time entropy constant with the 0*log(0) := 0 convention.
    ent = 0.0
    if confidence > 0.0:
        ent += confidence * math.log(confidence)
    if fill > 0.0:
        ent += (size - 1) * fill * math.log(fill)

    # TODO(synk): the PyTorch module also stashes `self.true_dist`; we never
    # materialize the full smoothed distribution (only the loss is needed).
    return jnp.sum(per_row) + jnp.float32(n * ent)


def _reference_loss(x_f32, target, size, smoothing):
    n = x_f32.shape[0]
    fill = 0.0 if smoothing == 0.0 else smoothing / (size - 2)
    conf = 1.0 - smoothing
    t = jnp.full((n, size), fill, jnp.float32).at[jnp.arange(n), target].set(conf)
    safe = jnp.where(t > 0, t, 1.0)
    return jnp.sum(jnp.where(t > 0, t * (jnp.log(safe) - x_f32), 0.0))


if __name__ == "__main__":
    key = jax.random.PRNGKey(0)
    N, V = 16, 256
    smoothing = 0.1

    k1, k2 = jax.random.split(key)
    logits = jax.random.normal(k1, (N, V), dtype=jnp.float32)
    x = jax.nn.log_softmax(logits, axis=-1)                       # log-probs (KLDivLoss input)
    target = jax.random.randint(k2, (N,), 0, V, dtype=jnp.int32)  # class indices

    # f32 with explicit small tiles: exercises the (2,2) grid / scratch accumulation.
    loss_f32 = label_smoothing_loss(x, target, size=V, smoothing=smoothing, tn=8, tv=128)
    jax.block_until_ready(loss_f32)
    ref_f32 = _reference_loss(x, target, V, smoothing)
    assert jnp.allclose(loss_f32, ref_f32, rtol=1e-4, atol=1e-4), (loss_f32, ref_f32)

    # Non-divisible shapes: exercises the zero-padding path with auto tiles.
    N2, V2 = 10, 300
    k3, k4 = jax.random.split(k2)
    x2 = jax.nn.log_softmax(jax.random.normal(k3, (N2, V2), jnp.float32), axis=-1)
    t2 = jax.random.randint(k4, (N2,), 0, V2, dtype=jnp.int32)
    loss2 = label_smoothing_loss(x2, t2, size=V2, smoothing=smoothing)
    jax.block_until_ready(loss2)
    ref2 = _reference_loss(x2, t2, V2, smoothing)
    assert jnp.allclose(loss2, ref2, rtol=1e-4, atol=1e-4), (loss2, ref2)

    # bf16: stays bf16 in VMEM, row reductions go through the MXU (f32 accumulate).
    x_bf16 = x.astype(jnp.bfloat16)
    loss_bf16 = label_smoothing_loss(x_bf16, target, size=V, smoothing=smoothing)
    jax.block_until_ready(loss_bf16)
    ref_bf16 = _reference_loss(x_bf16.astype(jnp.float32), target, V, smoothing)
    assert jnp.allclose(loss_bf16, ref_bf16, rtol=1e-4, atol=1e-4), (loss_bf16, ref_bf16)

    print("KERNEL_OK")
</pallas_src>

<mosaic_0001>
module attributes {stable_mosaic.version = 11 : i64} {
  func.func @_label_smoothing_kernel(%arg0: i32, %arg1: i32, %arg2: memref<8x128xf32, #tpu.memory_space<vmem>>, %arg3: memref<8x1xi32, #tpu.memory_space<vmem>>, %arg4: memref<8x1xf32, #tpu.memory_space<vmem>>, %arg5: memref<8x1xf32, #tpu.memory_space<vmem>>) attributes {dimension_semantics = [#tpu.dimension_semantics<parallel>, #tpu.dimension_semantics<arbitrary>], iteration_bounds = array<i64: 2, 2>, scalar_prefetch = 0 : i64, scratch_operands = 1 : i64, tpu.core_type = #tpu.core_type<tc>, window_params = [{transform_indices = @transform_0, window_bounds = array<i64: 8, 128>}, {transform_indices = @transform_1, window_bounds = array<i64: 8, 1>}, {transform_indices = @transform_2, window_bounds = array<i64: 8, 1>}]} {
    %c0_i32 = arith.constant 0 : i32
    %0 = arith.cmpi eq, %arg1, %c0_i32 : i32
    %1 = arith.extui %0 : i1 to i32
    %c0_i32_0 = arith.constant 0 : i32
    %2 = arith.cmpi ne, %1, %c0_i32_0 : i32
    scf.if %2 {
      %cst_13 = arith.constant 0.000000e+00 : f32
      %28 = vector.broadcast %cst_13 : f32 to vector<8x1xf32>
      %c0_14 = arith.constant 0 : index
      %c0_15 = arith.constant 0 : index
      %29 = vector.load %arg5[%c0_14, %c0_15] : memref<8x1xf32, #tpu.memory_space<vmem>>, vector<8x1xf32>
      tpu.vector_store %arg5[%c0_14, %c0_15], %28 {strides = array<i32>} : memref<8x1xf32, #tpu.memory_space<vmem>>, vector<8x1xf32>,
    } else {
    }
    %c0 = arith.constant 0 : index
    %c0_1 = arith.constant 0 : index
    %3 = vector.load %arg2[%c0, %c0_1] : memref<8x128xf32, #tpu.memory_space<vmem>>, vector<8x128xf32>
    %c0_2 = arith.constant 0 : index
    %c0_3 = arith.constant 0 : index
    %4 = vector.load %arg3[%c0_2, %c0_3] : memref<8x1xi32, #tpu.memory_space<vmem>>, vector<8x1xi32>
    %c128_i32 = arith.constant 128 : i32
    %5 = arith.muli %arg1, %c128_i32 : i32
    %6 = vector.broadcast %5 : i32 to vector<8x1xi32>
    %7 = arith.subi %4, %6 : vector<8x1xi32>
    %8 = tpu.iota {dimensions = array<i32: 1>} : vector<8x128xi32>
    %9 = vector.broadcast %7 : vector<8x1xi32> to vector<8x128xi32>
    %10 = arith.cmpi eq, %8, %9 : vector<8x128xi32>
    %cst = arith.constant 0.000000e+00 : f32
    %11 = vector.broadcast %cst : f32 to vector<8x128xf32>
    %12 = arith.select %10, %3, %11 : vector<8x128xi1>, vector<8x128xf32>
    %cst_4 = arith.constant dense<0.000000e+00> : vector<8xf32>
    %13 = vector.multi_reduction <add>, %3, %cst_4 [1] : vector<8x128xf32> to vector<8xf32>
    %14 = vector.shape_cast %13 : vector<8xf32> to vector<8x1xf32>
    %cst_5 = arith.constant dense<0.000000e+00> : vector<8xf32>
    %15 = vector.multi_reduction <add>, %12, %cst_5 [1] : vector<8x128xf32> to vector<8xf32>
    %16 = vector.shape_cast %15 : vector<8xf32> to vector<8x1xf32>
    %c0_6 = arith.constant 0 : index
    %c0_7 = arith.constant 0 : index
    %17 = vector.load %arg5[%c0_6, %c0_7] : memref<8x1xf32, #tpu.memory_space<vmem>>, vector<8x1xf32>
    %cst_8 = arith.constant 3.93700786E-4 : f32
    %18 = vector.broadcast %cst_8 : f32 to vector<8x1xf32>
    %19 = arith.mulf %18, %14 : vector<8x1xf32>
    %cst_9 = arith.constant 0.899606287 : f32
    %20 = vector.broadcast %cst_9 : f32 to vector<8x1xf32>
    %21 = arith.mulf %20, %16 : vector<8x1xf32>
    %22 = arith.addf %19, %21 : vector<8x1xf32>
    %23 = arith.addf %17, %22 : vector<8x1xf32>
    %c0_10 = arith.constant 0 : index
    %c0_11 = arith.constant 0 : index
    %24 = vector.load %arg5[%c0_10, %c0_11] : memref<8x1xf32, #tpu.memory_space<vmem>>, vector<8x1xf32>
    tpu.vector_store %arg5[%c0_10, %c0_11], %23 {strides = array<i32>} : memref<8x1xf32, #tpu.memory_space<vmem>>, vector<8x1xf32>,
    %c1_i32 = arith.constant 1 : i32
    %25 = arith.cmpi eq, %arg1, %c1_i32 : i32
    %26 = arith.extui %25 : i1 to i32
    %c0_i32_12 = arith.constant 0 : i32
    %27 = arith.cmpi ne, %26, %c0_i32_12 : i32
    scf.if %27 {
      %c0_13 = arith.constant 0 : index
      %c0_14 = arith.constant 0 : index
      %28 = vector.load %arg5[%c0_13, %c0_14] : memref<8x1xf32, #tpu.memory_space<vmem>>, vector<8x1xf32>
      %cst_15 = arith.constant 0.000000e+00 : f32
      %29 = vector.broadcast %cst_15 : f32 to vector<8x1xf32>
      %30 = arith.subf %29, %28 : vector<8x1xf32>
      %c0_16 = arith.constant 0 : index
      %c0_17 = arith.constant 0 : index
      %31 = vector.load %arg4[%c0_16, %c0_17] : memref<8x1xf32, #tpu.memory_space<vmem>>, vector<8x1xf32>
      tpu.vector_store %arg4[%c0_16, %c0_17], %30 {strides = array<i32>} : memref<8x1xf32, #tpu.memory_space<vmem>>, vector<8x1xf32>,
    } else {
    }
    return
  }
  func.func @transform_0(%arg0: i32, %arg1: i32) -> (i32, i32) {
    %c0_i32 = arith.constant 0 : i32
    return %arg0, %arg1 : i32, i32
  }
  func.func @transform_1(%arg0: i32, %arg1: i32) -> (i32, i32) {
    %c0_i32 = arith.constant 0 : i32
    %c0_i32_0 = arith.constant 0 : i32
    return %arg0, %c0_i32 : i32, i32
  }
  func.func @transform_2(%arg0: i32, %arg1: i32) -> (i32, i32) {
    %c0_i32 = arith.constant 0 : i32
    %c0_i32_0 = arith.constant 0 : i32
    return %arg0, %c0_i32 : i32, i32
  }
}

</mosaic_0001>

<llo_original>
// kernel: tpu_custom_call.1
$region0: #{tpu_custom_call.1}
  #allocation0 [shape = 'u32[]', space=smem, size = 0x4, offset = 0x4, fixed_abs, tag = 'smem constant byte address 0x4 - core index']
  #allocation1 [shape = 'u32[144,128]{1,0:T(1,128)}', space=vmem, size = 0x12000, scoped, tag = 'internal scratch']
  #allocation2 [shape = 'f32[8,1]{1,0:T(8,128)}', space=vmem, size = 0x1000, scoped, tag = 'scratch operand']
  %s0 = inlined_call_operand.hbm [shape: f32[16,256], index: 0, kind: input, shape index: {}]
  %s1 = inlined_call_operand.vmem [shape: s32[16,1], index: 1, kind: input, shape index: {}]
  %s2 = inlined_call_operand.vmem [shape: f32[16,1], index: 2, kind: output, shape index: {}]
  %s3 = sld [smem:[#allocation0]]
  $region53: #{tpu_custom_call.1} parent=0
    _
  %s5 = ssub.s32 1, %s3
  %s6 = scalar_select 0, %s5, %s3
  $region1: #{tpu_custom_call.1} parent=0
    #allocation3 [shape = 'u8[8192]{0}', space=vmem, size = 0x2000, scoped, tag = 'input window, operand 0']
    #allocation4 [shape = 's32[2]{0}', space=sflag, size = 0x8, scoped, tag = 'scoped memory for tpu_custom_call.1']
    %7 = vsyncpa [#allocation4], 0
    %s8 = scalar_lea.sflag [#allocation4], 1
    %9 = vsyncpa %s8, 0
    loop: start=0, step=1, limit=6
    $region2: #{tpu_custom_call.1} parent=1 // loop_pre_header
      _
    $region3: #{tpu_custom_call.1} parent=1 // loop_header
      %s11 = sphi 0, %s15
      %p12 = scmp.ge.s32.totalorder %s11, 6
      %s18 = sphi 0, %s30
      %s19 = sphi 0, %s26
      %s20 = sphi 0, %s18
      %s21 = sphi 0, %s19
      %s22 = sphi 0, %s20
      %s23 = sphi 0, %s21
      %s35 = sphi 0, %s37
      %s38 = sphi 0, %s35
      %s39 = sphi 0, %s38
      %s55 = sphi 0, %s39
      %s61 = sphi 0, %s63
      %s64 = sphi 0, %s61
      %s65 = sphi 0, %s64
      %s81 = sphi 0, %s65
      %s87 = sphi 0, %s89
      %s90 = sphi 0, %s87
      %s91 = sphi 0, %s90
      %s107 = sphi 0, %s91
    $region4: #{tpu_custom_call.1} parent=1 // loop_header_branch
      %14 = sbr.rel (%p12) target = $region8
    $region5: #{tpu_custom_call.1} parent=1 // loop_body
      %s16 = ssub.s32 %s11, 1
      %s17 = ssub.s32 %s11, 2
      %s24 = sadd.s32 1, %s19
      %p25 = scmp.ge.s32.totalorder %s24, 2
      %s26 = scalar_select %p25, 0, %s24
      %s27 = sadd.s32 1, %s18
      %s28 = scalar_select %p25, %s27, %s18
      %p29 = scmp.ge.s32.totalorder %s28, 2
      %s30 = scalar_select %p29, 0, %s28
      %s31 = ssub.s32 %s18, %s30
      %s32 = ssub.s32 %s19, %s26
      %s33 = sor.u32 %s31, %s32
      %p34 = scmp.eq.s32.totalorder %s33, 0
      %s36 = sadd.s32 %s35, 1
      %s37 = scalar_select %p34, %s35, %s36
      %p40 = pneg %p34
      %p41 = scmp.eq.s32.totalorder %s11, 3
      %p42 = por %p40, %p41
      %p43 = scmp.ne.s32.totalorder %s35, %s38
      %p44 = scmp.eq.s32.totalorder %s11, 0
      %p45 = por %p43, %p44
      %p46 = scmp.ne.s32.totalorder %s35, %s38
      %p47 = scmp.eq.s32.totalorder %s16, 3
      %p48 = por %p46, %p47
      %p49 = scmp.ne.s32.totalorder %s38, %s39
      %p50 = scmp.eq.s32.totalorder %s16, 0
      %p51 = por %p49, %p50
      %p52 = scmp.ne.s32.totalorder %s38, %s39
      %p53 = scmp.eq.s32.totalorder %s17, 3
      %p54 = por %p52, %p53
      %p56 = scmp.ne.s32.totalorder %s39, %s55
      %p57 = scmp.eq.s32.totalorder %s17, 0
      %p58 = por %p56, %p57
      %s59 = ssub.s32 %s18, %s30
      %p60 = scmp.eq.s32.totalorder %s59, 0
      %s62 = sadd.s32 %s61, 1
      %s63 = scalar_select %p60, %s61, %s62
      %p66 = pneg %p60
      %p67 = scmp.eq.s32.totalorder %s11, 3
      %p68 = por %p66, %p67
      %p69 = scmp.ne.s32.totalorder %s61, %s64
      %p70 = scmp.eq.s32.totalorder %s11, 0
      %p71 = por %p69, %p70
      %p72 = scmp.ne.s32.totalorder %s61, %s64
      %p73 = scmp.eq.s32.totalorder %s16, 3
      %p74 = por %p72, %p73
      %p75 = scmp.ne.s32.totalorder %s64, %s65
      %p76 = scmp.eq.s32.totalorder %s16, 0
      %p77 = por %p75, %p76
      %p78 = scmp.ne.s32.totalorder %s64, %s65
      %p79 = scmp.eq.s32.totalorder %s17, 3
      %p80 = por %p78, %p79
      %p82 = scmp.ne.s32.totalorder %s65, %s81
      %p83 = scmp.eq.s32.totalorder %s17, 0
      %p84 = por %p82, %p83
      %s85 = ssub.s32 %s18, %s30
      %p86 = scmp.eq.s32.totalorder %s85, 0
      %s88 = sadd.s32 %s87, 1
      %s89 = scalar_select %p86, %s87, %s88
      %p92 = pneg %p86
      %p93 = scmp.eq.s32.totalorder %s11, 3
      %p94 = por %p92, %p93
      %p95 = scmp.ne.s32.totalorder %s87, %s90
      %p96 = scmp.eq.s32.totalorder %s11, 0
      %p97 = por %p95, %p96
      %p98 = scmp.ne.s32.totalorder %s87, %s90
      %p99 = scmp.eq.s32.totalorder %s16, 3
      %p100 = por %p98, %p99
      %p101 = scmp.ne.s32.totalorder %s90, %s91
      %p102 = scmp.eq.s32.totalorder %s16, 0
      %p103 = por %p101, %p102
      %p104 = scmp.ne.s32.totalorder %s90, %s91
      %p105 = scmp.eq.s32.totalorder %s17, 3
      %p106 = por %p104, %p105
      %p108 = scmp.ne.s32.totalorder %s91, %s107
      %p109 = scmp.eq.s32.totalorder %s17, 0
      %p110 = por %p108, %p109
      %p111 = scmp.le.s32.totalorder 1, %s11
      %p112 = scmp.lt.s32.totalorder %s11, 5
      %p113 = pnand %p111, %p112
      %p114 = pneg %p113
      // Predicated region
      $region9: #{tpu_custom_call.1} parent=5 // pred_check
        _
      $region10: #{tpu_custom_call.1} parent=5 // pred_check_branch
        %116 = sbr.rel (%p113) target = $region12
      $region11: #{tpu_custom_call.1} parent=5 // pred_region
        %s117 = ssub.s32 %s11, 1
      $region12: #{tpu_custom_call.1} parent=5 // pred_fallthru
        _
      %p118 = scmp.lt.s32.totalorder %s11, 4
      // Predicated region
      $region13: #{tpu_custom_call.1} parent=5 // pred_check
        %p119 = pneg %p118
      $region14: #{tpu_custom_call.1} parent=5 // pred_check_branch
        %121 = sbr.rel (%p119) target = $region16
      $region15: #{tpu_custom_call.1} parent=5 // pred_region
        // Predicated region
        $region17: #{tpu_custom_call.1} parent=15 // pred_check
          %p122 = pneg %p45
        $region18: #{tpu_custom_call.1} parent=15 // pred_check_branch
          %124 = sbr.rel (%p122) target = $region20
        $region19: #{tpu_custom_call.1} parent=15 // pred_region
          %s125 = sand.u32 %s35, 1
          %s126 = scalar_lea.sflag [#allocation4], %s125
          %s127 = sand.u32 %s35, 1
          %s128 = smul.addr %s127, 8
          %s129 = scalar_lea.vmem [#allocation3], %s128
          %s131 = ssub.s32 128, 128
          %132 = vsyncadd %s126, %s131
          %s133 = smul.addr %s18, 2
          %s134 = sadd.s32 %s19, %s133
          %s135 = smul.addr %s134, 128
          %s136 = scalar_lea.hbm %s0, %s135
          %s138 = sshll.u32 %s129, 4
          %s139 = int_to_ptr.vmem [resolvable:$true] %s138
          %141 = dma.hbm_to_vmem [thread:$0]  %s136, 128, %s139, %s126
        $region20: #{tpu_custom_call.1} parent=15 // pred_fallthru
          _
        // Predicated region
        $region21: #{tpu_custom_call.1} parent=15 // pred_check
          %p142 = pneg %p71
        $region22: #{tpu_custom_call.1} parent=15 // pred_check_branch
          %144 = sbr.rel (%p142) target = $region24
        $region23: #{tpu_custom_call.1} parent=15 // pred_region
          %p145 = scmp.lt.s32.totalorder %s18, 1
          %s146 = scalar_select %p145, %s18, 1
          %s147 = smul.addr %s146, 8
          %s148 = scalar_lea.vmem %s1, %s147
        $region24: #{tpu_custom_call.1} parent=15 // pred_fallthru
          _
      $region16: #{tpu_custom_call.1} parent=5 // pred_fallthru
        _
      %p149 = scmp.le.s32.totalorder 1, %s11
      %p150 = scmp.lt.s32.totalorder %s11, 5
      %p151 = pnand %p149, %p150
      %p152 = pneg %p151
      // Predicated region
      $region25: #{tpu_custom_call.1} parent=5 // pred_check
        _
      $region26: #{tpu_custom_call.1} parent=5 // pred_check_branch
        %154 = sbr.rel (%p151) target = $region28
      $region27: #{tpu_custom_call.1} parent=5 // pred_region
        %s155 = ssub.s32 %s11, 1
        %s156 = sand.u32 %s38, 1
        %s157 = scalar_lea.sflag [#allocation4], %s156
        %s158 = sand.u32 %s38, 1
        %s159 = smul.addr %s158, 8
        %s160 = scalar_lea.vmem [#allocation3], %s159
        // Predicated region
        $region29: #{tpu_custom_call.1} parent=27 // pred_check
          %p161 = pneg %p51
        $region30: #{tpu_custom_call.1} parent=27 // pred_check_branch
          %163 = sbr.rel (%p161) target = $region32
        $region31: #{tpu_custom_call.1} parent=27 // pred_region
          %164 = dma.done %s157, 128
        $region32: #{tpu_custom_call.1} parent=27 // pred_fallthru
          _
        %s165 = sand.u32 %s38, 1
        %s166 = scalar_lea.sflag [#allocation4], %s165
        %s167 = sand.u32 %s38, 1
        %s168 = smul.addr %s167, 8
        %s169 = scalar_lea.vmem [#allocation3], %s168
        %p170 = pneg %p51
        %p171 = pneg %p48
        %p172 = scmp.lt.s32.totalorder %s20, 1
        %s173 = scalar_select %p172, %s20, 1
        %s174 = smul.addr %s173, 8
        %s175 = scalar_lea.vmem %s1, %s174
        %p176 = pneg %p77
        %p177 = pneg %p74
        %p178 = pneg %p103
        %p179 = pneg %p100
        %p180 = scmp.lt.s32.totalorder %s20, 1
        %s181 = scalar_select %p180, %s20, 1
        %s182 = smul.addr %s181, 8
        %s183 = scalar_lea.vmem %s2, %s182
        %p184 = scmp.lt.s32.totalorder %s20, 1
        %s185 = scalar_select %p184, %s20, 1
        %s186 = smul.addr %s185, 8
        %s187 = scalar_lea.vmem %s1, %s186
        %p188 = scmp.lt.s32.totalorder %s20, 1
        %s189 = scalar_select %p188, %s20, 1
        %s190 = smul.addr %s189, 8
        %s191 = scalar_lea.vmem %s2, %s190
        %p192 = scmp.eq.s32.totalorder %s21, 0
        // Predicated region
        $region33: #{tpu_custom_call.1} parent=27 // pred_check
          %p193 = pneg %p192
        $region34: #{tpu_custom_call.1} parent=27 // pred_check_branch
          %195 = sbr.rel (%p193) target = $region36
        $region35: #{tpu_custom_call.1} parent=27 // pred_region
          %vm196 = vcmask 7168
          %197 = vst.msk [vmem:[#allocation2] sm:$0xff] %vm196, 0.0
        $region36: #{tpu_custom_call.1} parent=27 // pred_fallthru
          _
        %v198 = vld [vmem:[%s160] sm:$0xff]
        %v199 = vld [vmem:[%s187] sm:$0xff]
        %s200 = smul.u32 %s21, 128
        %v201 = vstv %s200
        %v202 = vsub.s32 %v199, %v201
        %v203 = vlaneseq
        %v204 = vand.u32 %v203, 127
        %205 = vset.pattern.permute.xlu0 0
        %206 = vperm.xlu0 %205, %v202
        %v207 = vpop.permute.xlu0 %206
        %vm208 = vcmp.eq.s32.totalorder %v204, %v207
        %v209 = vsel %vm208, %v198, 0.0
        %210 = vadd.xlane.f32.xlu0 %v198
        %v211 = vpop.xlane.xlu0 %210
        %212 = vadd.xlane.f32.xlu0 %v209
        %v213 = vpop.xlane.xlu0 %212
        %v214 = vld [vmem:[#allocation2] sm:$0xff]
        %v215 = vmul.f32 %v211, 0.0003937008
        %v216 = vmul.f32 %v213, 0.8996063
        %v217 = vadd.f32 %v215, %v216
        %v218 = vadd.f32 %v214, %v217
        %vm219 = vcmask 7168
        %220 = vst.msk [vmem:[#allocation2] sm:$0xff] %vm219, %v218
        %p221 = scmp.eq.s32.totalorder %s21, 1
        // Predicated region
        $region37: #{tpu_custom_call.1} parent=27 // pred_check
          %p222 = pneg %p221
        $region38: #{tpu_custom_call.1} parent=27 // pred_check_branch
          %224 = sbr.rel (%p222) target = $region40
        $region39: #{tpu_custom_call.1} parent=27 // pred_region
          %v225 = vld [vmem:[#allocation2] sm:$0xff]
          %v226 = vsub.f32 0.0, %v225
          %227 = vst.msk [vmem:[%s191] sm:$0xff] %vm219, %v226
        $region40: #{tpu_custom_call.1} parent=27 // pred_fallthru
          _
        %p228 = scmp.lt.s32.totalorder %s20, 1
        %s229 = scalar_select %p228, %s20, 1
        %s230 = smul.addr %s229, 8
        %s231 = scalar_lea.vmem %s2, %s230
        // Predicated region
        $region41: #{tpu_custom_call.1} parent=27 // pred_check
          %p232 = pneg %p100
        $region42: #{tpu_custom_call.1} parent=27 // pred_check_branch
          %234 = sbr.rel (%p232) target = $region44
        $region43: #{tpu_custom_call.1} parent=27 // pred_region
          _
        $region44: #{tpu_custom_call.1} parent=27 // pred_fallthru
          _
      $region28: #{tpu_custom_call.1} parent=5 // pred_fallthru
        _
      %p235 = scmp.le.s32.totalorder 2, %s11
      // Predicated region
      $region45: #{tpu_custom_call.1} parent=5 // pred_check
        %p236 = pneg %p235
      $region46: #{tpu_custom_call.1} parent=5 // pred_check_branch
        %238 = sbr.rel (%p236) target = $region48
      $region47: #{tpu_custom_call.1} parent=5 // pred_region
        %s239 = ssub.s32 %s11, 2
        // Predicated region
        $region49: #{tpu_custom_call.1} parent=47 // pred_check
          %p240 = pneg %p106
        $region50: #{tpu_custom_call.1} parent=47 // pred_check_branch
          %242 = sbr.rel (%p240) target = $region52
        $region51: #{tpu_custom_call.1} parent=47 // pred_region
          %p243 = scmp.lt.s32.totalorder %s22, 1
          %s244 = scalar_select %p243, %s22, 1
          %s245 = smul.addr %s244, 8
          %s246 = scalar_lea.vmem %s2, %s245
        $region52: #{tpu_custom_call.1} parent=47 // pred_fallthru
          _
      $region48: #{tpu_custom_call.1} parent=5 // pred_fallthru
        _
    $region6: #{tpu_custom_call.1} parent=1 // loop_footer
      %s15 = sadd.s32 1, %s11
    $region7: #{tpu_custom_call.1} parent=1 // loop_footer_branch
      %10 = sbr.rel target = $region3
    $region8: #{tpu_custom_call.1} parent=1 // loop_exit
      _
    %247 = vsyncpa [#allocation4], 1
    %s248 = scalar_lea.sflag [#allocation4], 1
    %249 = vsyncpa %s248, 1

</llo_original>
